<compile_context>
chip_gen: v7x
topology: tpu7x:2x2x1
jax: 0.10.0
libtpu: 0.0.40
codegen_flags: <defaults>
</compile_context>

<pallas_src>
import jax
import jax.numpy as jnp
from jax.experimental import pallas as pl
from jax.experimental.pallas import tpu as pltpu


def _round_up(x, m):
    return ((x + m - 1) // m) * m


def _mlp_decoder_kernel(x_ref, w1_ref, b1_ref, w2_ref, b2_ref, w3_ref, b3_ref, o_ref):
    """One folded slab of points (F points per row, row-major / points-on-sublanes).

    x_ref : (TR, F*input_dim)        lane-dense folded inputs
    w*_ref: (F*in_l, F*out_l)        kron(I_F, W_l^T), compute dtype (stationary MXU operand)
    b*_ref: (1, F*out_l)             f32 biases tiled F times (broadcast over rows)
    o_ref : (TR, F*output_dim)       folded outputs
    """
    cdt = w1_ref.dtype                              # matmul compute dtype (bf16 or f32)
    x = x_ref[...].astype(cdt)                      # cast in-kernel (vreg work only)

    # Layer 1: Linear + ReLU.  Weight is the stationary operand, x rows streamed.
    h = jnp.dot(x, w1_ref[...], preferred_element_type=jnp.float32)
    h = jnp.maximum(h + b1_ref[...], 0.0)

    # Layer 2: Linear + ReLU.
    h = jnp.dot(h.astype(cdt), w2_ref[...], preferred_element_type=jnp.float32)
    h = jnp.maximum(h + b2_ref[...], 0.0)

    # Layer 3: Linear + Tanh.  With the fold, the (256, F*O) weight is still pushed
    # only once per tile, so keeping it on the MXU is fine.
    out = jnp.dot(h.astype(cdt), w3_ref[...], preferred_element_type=jnp.float32)
    out = jnp.tanh(out + b3_ref[...])

    o_ref[...] = out.astype(o_ref.dtype)


def mlp_decoder(features, params, *, tile_m=16384, compute_dtype=jnp.bfloat16,
                vmem_limit_bytes=48 * 1024 * 1024):
    """features: (..., input_dim). Returns (..., output_dim) float32.

    tile_m = points per grid step (default 16384 ~ 10 MB of VMEM incl. double buffers,
    comfortably inside the explicit 48 MiB limit on all gens incl. v7x's 64 MiB).
    """
    w1, b1, w2, b2, w3, b3 = params
    *lead, input_dim = features.shape
    hidden_dim = w1.shape[0]
    output_dim = w3.shape[0]
    assert w1.shape == (hidden_dim, input_dim)
    assert w2.shape == (hidden_dim, hidden_dim)
    assert w3.shape == (output_dim, hidden_dim)

    # Fold factor: pack F points per row so the x block's minor dim is 128 (lane-dense
    # DMA, no lane padding).  Falls back to F=1 (plain row-major) otherwise.
    F = 128 // input_dim if (input_dim <= 128 and 128 % input_dim == 0) else 1
    assert tile_m % (8 * F) == 0, "tile_m must be a multiple of 8*fold (sublane rule)"

    x = features.reshape(-1, input_dim)
    N = x.shape[0]
    N_pad = _round_up(N, F)
    if N_pad != N:
        x = jnp.pad(x, ((0, N_pad - N), (0, 0)))     # tiny; padded rows sliced off below
    xf = x.reshape(N_pad // F, F * input_dim)        # free row-major view

    # Block-diagonal weights: kron(I_F, W^T) keeps the tiny weight as the stationary
    # MXU operand while each streamed row carries F points.  Biases tiled to match.
    eye = jnp.eye(F, dtype=jnp.float32)
    w1f = jnp.kron(eye, w1.T.astype(jnp.float32)).astype(compute_dtype)
    w2f = jnp.kron(eye, w2.T.astype(jnp.float32)).astype(compute_dtype)
    w3f = jnp.kron(eye, w3.T.astype(jnp.float32)).astype(compute_dtype)
    b1f = jnp.tile(b1.astype(jnp.float32), F).reshape(1, F * hidden_dim)
    b2f = jnp.tile(b2.astype(jnp.float32), F).reshape(1, F * hidden_dim)
    b3f = jnp.tile(b3.astype(jnp.float32), F).reshape(1, F * output_dim)

    R = N_pad // F                                   # folded rows
    tr = max(8, min(tile_m // F, _round_up(R, 8)))   # folded rows per grid step
    # Keep the grid >= 2 steps when there is enough work so ("parallel",) can split
    # across v7x's two TensorCores (v5e/v6e are single-TC; harmless there).
    if R > 16 and tr >= R:
        tr = _round_up(pl.cdiv(R, 2), 8)
    grid = (pl.cdiv(R, tr),)                         # Pallas masks the ragged tail

    const = lambda i: (0, 0)   # weights/biases: same block every step -> stay resident
    # TODO(synk): pipeline_mode=pl.Buffered(1) on the constant specs would drop their
    # redundant second buffer (~hundreds of KB); left out to keep lowering portable.

    out_f = pl.pallas_call(
        _mlp_decoder_kernel,
        out_shape=jax.ShapeDtypeStruct((R, F * output_dim), jnp.float32),
        grid_spec=pltpu.PrefetchScalarGridSpec(
            num_scalar_prefetch=0,
            grid=grid,
            in_specs=[
                pl.BlockSpec((tr, F * input_dim), lambda i: (i, 0)),
                pl.BlockSpec((F * input_dim, F * hidden_dim), const),
                pl.BlockSpec((1, F * hidden_dim), const),
                pl.BlockSpec((F * hidden_dim, F * hidden_dim), const),
                pl.BlockSpec((1, F * hidden_dim), const),
                pl.BlockSpec((F * hidden_dim, F * output_dim), const),
                pl.BlockSpec((1, F * output_dim), const),
            ],
            out_specs=pl.BlockSpec((tr, F * output_dim), lambda i: (i, 0)),
        ),
        compiler_params=pltpu.CompilerParams(
            dimension_semantics=("parallel",),       # independent row tiles
            vmem_limit_bytes=vmem_limit_bytes,
        ),
    )(xf, w1f, b1f, w2f, b2f, w3f, b3f)

    out = out_f.reshape(N_pad, output_dim)           # free row-major view, no transpose
    if N_pad != N:
        out = out[:N]
    return out.reshape(*lead, output_dim)


def init_params(key, input_dim, hidden_dim, output_dim=1):
    """Deterministic synthetic parameters in PyTorch nn.Linear layout (out, in)."""
    ks = jax.random.split(key, 6)
    w1 = jax.random.normal(ks[0], (hidden_dim, input_dim), jnp.float32) * 0.1
    b1 = jax.random.normal(ks[1], (hidden_dim,), jnp.float32) * 0.1
    w2 = jax.random.normal(ks[2], (hidden_dim, hidden_dim), jnp.float32) * 0.1
    b2 = jax.random.normal(ks[3], (hidden_dim,), jnp.float32) * 0.1
    w3 = jax.random.normal(ks[4], (output_dim, hidden_dim), jnp.float32) * 0.1
    b3 = jax.random.normal(ks[5], (output_dim,), jnp.float32) * 0.1
    return (w1, b1, w2, b2, w3, b3)


def mlp_decoder_ref(features, params, compute_dtype=jnp.float32):
    """Pure-JAX reference (row-major) with matching matmul compute dtype."""
    w1, b1, w2, b2, w3, b3 = params

    def linear(x, w, b):
        y = jnp.dot(x.astype(compute_dtype), w.T.astype(compute_dtype),
                    preferred_element_type=jnp.float32)
        return y + b.astype(jnp.float32)

    h = jnp.maximum(linear(features, w1, b1), 0.0)
    h = jnp.maximum(linear(h, w2, b2), 0.0)
    return jnp.tanh(linear(h, w3, b3))


if __name__ == "__main__":
    key = jax.random.PRNGKey(0)
    k_feat, k_param = jax.random.split(key)

    N, input_dim, hidden_dim, output_dim = 1000, 16, 32, 1
    features = jax.random.normal(k_feat, (N, input_dim), jnp.float32)
    params = init_params(k_param, input_dim, hidden_dim, output_dim)

    ref_f32 = mlp_decoder_ref(features, params, compute_dtype=jnp.float32)
    ref_bf16 = mlp_decoder_ref(features, params, compute_dtype=jnp.bfloat16)

    # Small tile_m so the tiny demo still exercises a multi-step grid (4 steps incl. a
    # ragged tail); real workloads use the tile_m=16384 default.
    out = jax.block_until_ready(mlp_decoder(features, params, tile_m=256))
    assert out.shape == (N, output_dim), out.shape
    assert float(jnp.max(jnp.abs(out - ref_bf16))) < 5e-3, float(
        jnp.max(jnp.abs(out - ref_bf16)))
    assert float(jnp.max(jnp.abs(out - ref_f32))) < 3e-2, float(
        jnp.max(jnp.abs(out - ref_f32)))

    # Strict f32 path (same kernel, compute_dtype=f32) against the f32 reference.
    out_f32 = jax.block_until_ready(
        mlp_decoder(features, params, tile_m=256, compute_dtype=jnp.float32))
    assert float(jnp.max(jnp.abs(out_f32 - ref_f32))) < 5e-3, float(
        jnp.max(jnp.abs(out_f32 - ref_f32)))

    # Producer-supplied bf16 features (halves x HBM traffic; no wrapper cast).
    out_bf16_in = jax.block_until_ready(
        mlp_decoder(features.astype(jnp.bfloat16), params, tile_m=256))
    assert out_bf16_in.shape == (N, output_dim)
    assert float(jnp.max(jnp.abs(out_bf16_in - ref_f32))) < 5e-2, float(
        jnp.max(jnp.abs(out_bf16_in - ref_f32)))

    print("KERNEL_OK")
</pallas_src>

<mosaic_0001>
module attributes {stable_mosaic.version = 11 : i64} {
  func.func @_mlp_decoder_kernel(%arg0: i32, %arg1: memref<32x128xf32, #tpu.memory_space<vmem>>, %arg2: memref<128x256xbf16, #tpu.memory_space<vmem>>, %arg3: memref<1x256xf32, #tpu.memory_space<vmem>>, %arg4: memref<256x256xbf16, #tpu.memory_space<vmem>>, %arg5: memref<1x256xf32, #tpu.memory_space<vmem>>, %arg6: memref<256x8xbf16, #tpu.memory_space<vmem>>, %arg7: memref<1x8xf32, #tpu.memory_space<vmem>>, %arg8: memref<32x8xf32, #tpu.memory_space<vmem>>) attributes {dimension_semantics = [#tpu.dimension_semantics<parallel>], iteration_bounds = array<i64: 4>, scalar_prefetch = 0 : i64, scratch_operands = 0 : i64, tpu.core_type = #tpu.core_type<tc>, window_params = [{transform_indices = @transform_0, window_bounds = array<i64: 32, 128>}, {pipeline_mode = #tpu.pipeline_mode<synchronous>, transform_indices = @transform_1, window_bounds = array<i64: 128, 256>}, {pipeline_mode = #tpu.pipeline_mode<synchronous>, transform_indices = @transform_2, window_bounds = array<i64: 1, 256>}, {pipeline_mode = #tpu.pipeline_mode<synchronous>, transform_indices = @transform_3, window_bounds = array<i64: 256, 256>}, {pipeline_mode = #tpu.pipeline_mode<synchronous>, transform_indices = @transform_4, window_bounds = array<i64: 1, 256>}, {pipeline_mode = #tpu.pipeline_mode<synchronous>, transform_indices = @transform_5, window_bounds = array<i64: 256, 8>}, {pipeline_mode = #tpu.pipeline_mode<synchronous>, transform_indices = @transform_6, window_bounds = array<i64: 1, 8>}, {transform_indices = @transform_7, window_bounds = array<i64: 32, 8>}]} {
    %c0 = arith.constant 0 : index
    %c0_0 = arith.constant 0 : index
    %0 = vector.load %arg1[%c0, %c0_0] : memref<32x128xf32, #tpu.memory_space<vmem>>, vector<32x128xf32>
    %1 = arith.truncf %0 : vector<32x128xf32> to vector<32x128xbf16>
    %c0_1 = arith.constant 0 : index
    %c0_2 = arith.constant 0 : index
    %2 = vector.load %arg2[%c0_1, %c0_2] : memref<128x256xbf16, #tpu.memory_space<vmem>>, vector<128x256xbf16>
    %cst = arith.constant dense<0.000000e+00> : vector<32x256xf32>
    %3 = tpu.matmul %1, %2, %cst {dimension_numbers = #tpu.dot_dimension_numbers<[1], [0], [0], [1], [0, 0, 1, 1], [], []>} : vector<32x128xbf16>, vector<128x256xbf16>, vector<32x256xf32> -> vector<32x256xf32>
    %c0_3 = arith.constant 0 : index
    %c0_4 = arith.constant 0 : index
    %4 = vector.load %arg3[%c0_3, %c0_4] : memref<1x256xf32, #tpu.memory_space<vmem>>, vector<1x256xf32>
    %5 = vector.broadcast %4 : vector<1x256xf32> to vector<32x256xf32>
    %6 = arith.addf %3, %5 : vector<32x256xf32>
    %cst_5 = arith.constant 0.000000e+00 : f32
    %7 = vector.broadcast %cst_5 : f32 to vector<32x256xf32>
    %8 = arith.maximumf %6, %7 : vector<32x256xf32>
    %9 = arith.truncf %8 : vector<32x256xf32> to vector<32x256xbf16>
    %c0_6 = arith.constant 0 : index
    %c0_7 = arith.constant 0 : index
    %10 = vector.load %arg4[%c0_6, %c0_7] : memref<256x256xbf16, #tpu.memory_space<vmem>>, vector<256x256xbf16>
    %cst_8 = arith.constant dense<0.000000e+00> : vector<32x256xf32>
    %11 = tpu.matmul %9, %10, %cst_8 {dimension_numbers = #tpu.dot_dimension_numbers<[1], [0], [0], [1], [0, 0, 1, 1], [], []>} : vector<32x256xbf16>, vector<256x256xbf16>, vector<32x256xf32> -> vector<32x256xf32>
    %c0_9 = arith.constant 0 : index
    %c0_10 = arith.constant 0 : index
    %12 = vector.load %arg5[%c0_9, %c0_10] : memref<1x256xf32, #tpu.memory_space<vmem>>, vector<1x256xf32>
    %13 = vector.broadcast %12 : vector<1x256xf32> to vector<32x256xf32>
    %14 = arith.addf %11, %13 : vector<32x256xf32>
    %cst_11 = arith.constant 0.000000e+00 : f32
    %15 = vector.broadcast %cst_11 : f32 to vector<32x256xf32>
    %16 = arith.maximumf %14, %15 : vector<32x256xf32>
    %17 = arith.truncf %16 : vector<32x256xf32> to vector<32x256xbf16>
    %c0_12 = arith.constant 0 : index
    %c0_13 = arith.constant 0 : index
    %18 = vector.load %arg6[%c0_12, %c0_13] : memref<256x8xbf16, #tpu.memory_space<vmem>>, vector<256x8xbf16>
    %cst_14 = arith.constant dense<0.000000e+00> : vector<32x8xf32>
    %19 = tpu.matmul %17, %18, %cst_14 {dimension_numbers = #tpu.dot_dimension_numbers<[1], [0], [0], [1], [0, 0, 1, 1], [], []>} : vector<32x256xbf16>, vector<256x8xbf16>, vector<32x8xf32> -> vector<32x8xf32>
    %c0_15 = arith.constant 0 : index
    %c0_16 = arith.constant 0 : index
    %20 = vector.load %arg7[%c0_15, %c0_16] : memref<1x8xf32, #tpu.memory_space<vmem>>, vector<1x8xf32>
    %21 = vector.broadcast %20 : vector<1x8xf32> to vector<32x8xf32>
    %22 = arith.addf %19, %21 : vector<32x8xf32>
    %23 = math.tanh %22 : vector<32x8xf32>
    %c0_17 = arith.constant 0 : index
    %c0_18 = arith.constant 0 : index
    %24 = vector.load %arg8[%c0_17, %c0_18] : memref<32x8xf32, #tpu.memory_space<vmem>>, vector<32x8xf32>
    tpu.vector_store %arg8[%c0_17, %c0_18], %23 {strides = array<i32>} : memref<32x8xf32, #tpu.memory_space<vmem>>, vector<32x8xf32>,
    return
  }
  func.func @transform_0(%arg0: i32) -> (i32, i32) {
    %c0_i32 = arith.constant 0 : i32
    %c0_i32_0 = arith.constant 0 : i32
    return %arg0, %c0_i32 : i32, i32
  }
  func.func @transform_1(%arg0: i32) -> (i32, i32) {
    %c0_i32 = arith.constant 0 : i32
    %c0_i32_0 = arith.constant 0 : i32
    %c0_i32_1 = arith.constant 0 : i32
    return %c0_i32, %c0_i32_0 : i32, i32
  }
  func.func @transform_2(%arg0: i32) -> (i32, i32) {
    %c0_i32 = arith.constant 0 : i32
    %c0_i32_0 = arith.constant 0 : i32
    %c0_i32_1 = arith.constant 0 : i32
    return %c0_i32, %c0_i32_0 : i32, i32
  }
  func.func @transform_3(%arg0: i32) -> (i32, i32) {
    %c0_i32 = arith.constant 0 : i32
    %c0_i32_0 = arith.constant 0 : i32
    %c0_i32_1 = arith.constant 0 : i32
    return %c0_i32, %c0_i32_0 : i32, i32
  }
  func.func @transform_4(%arg0: i32) -> (i32, i32) {
    %c0_i32 = arith.constant 0 : i32
    %c0_i32_0 = arith.constant 0 : i32
    %c0_i32_1 = arith.constant 0 : i32
    return %c0_i32, %c0_i32_0 : i32, i32
  }
  func.func @transform_5(%arg0: i32) -> (i32, i32) {
    %c0_i32 = arith.constant 0 : i32
    %c0_i32_0 = arith.constant 0 : i32
    %c0_i32_1 = arith.constant 0 : i32
    return %c0_i32, %c0_i32_0 : i32, i32
  }
  func.func @transform_6(%arg0: i32) -> (i32, i32) {
    %c0_i32 = arith.constant 0 : i32
    %c0_i32_0 = arith.constant 0 : i32
    %c0_i32_1 = arith.constant 0 : i32
    return %c0_i32, %c0_i32_0 : i32, i32
  }
  func.func @transform_7(%arg0: i32) -> (i32, i32) {
    %c0_i32 = arith.constant 0 : i32
    %c0_i32_0 = arith.constant 0 : i32
    return %arg0, %c0_i32 : i32, i32
  }
}

</mosaic_0001>

<llo_original>
// kernel: tpu_custom_call.1
$region0: #{tpu_custom_call.1}
  #allocation0 [shape = 'u32[]', space=smem, size = 0x4, offset = 0x4, fixed_abs, tag = 'smem constant byte address 0x4 - core index']
  #allocation1 [shape = 'u32[144,128]{1,0:T(1,128)}', space=vmem, size = 0x12000, scoped, tag = 'internal scratch']
  %s0 = inlined_call_operand.vmem [shape: f32[125,128], index: 0, kind: input, shape index: {}]
  %s1 = inlined_call_operand.hbm [shape: bf16[128,256], index: 1, kind: input, shape index: {}]
  %s2 = inlined_call_operand.vmem [shape: f32[1,256], index: 2, kind: input, shape index: {}]
  %s3 = inlined_call_operand.hbm [shape: bf16[256,256], index: 3, kind: input, shape index: {}]
  %s4 = inlined_call_operand.vmem [shape: f32[1,256], index: 4, kind: input, shape index: {}]
  %s5 = inlined_call_operand.vmem [shape: bf16[256,8], index: 5, kind: input, shape index: {}]
  %s6 = inlined_call_operand.vmem [shape: f32[1,8], index: 6, kind: input, shape index: {}]
  %s7 = inlined_call_operand.vmem [shape: f32[125,8], index: 7, kind: output, shape index: {}]
  %s8 = sld [smem:[#allocation0]]
  $region69: #{tpu_custom_call.1} parent=0
    _
  %s10 = ssub.s32 1, %s8
  %s11 = scalar_select 0, %s10, %s8
  $region1: #{tpu_custom_call.1} parent=0
    #allocation2 [shape = 'u8[65536]{0}', space=vmem, size = 0x10000, scoped, tag = 'input window, operand 1, single buffered']
    #allocation3 [shape = 's32[2]{0}', space=sflag, size = 0x8, scoped, tag = 'scoped memory for tpu_custom_call.1']
    #allocation4 [shape = 'u8[131072]{0}', space=vmem, size = 0x20000, scoped, tag = 'input window, operand 3, single buffered']
    #allocation5 [shape = 's32[1]{0}', space=sflag, size = 0x4, scoped, tag = 'scoped memory for tpu_custom_call.1']
    %12 = vsyncpa [#allocation3], 0
    %13 = vsyncpa [#allocation5], 0
    loop: start=0, step=1, limit=6
    $region2: #{tpu_custom_call.1} parent=1 // loop_pre_header
      _
    $region3: #{tpu_custom_call.1} parent=1 // loop_header
      %s15 = sphi 0, %s19
      %p16 = scmp.ge.s32.totalorder %s15, 6
      %s25 = sphi 0, %s27
      %s28 = sphi 0, %s25
      %s29 = sphi 0, %s28
      %s45 = sphi 0, %s29
      %s49 = sphi 0, %s49
      %s51 = sphi 0, %s49
      %s52 = sphi 0, %s51
      %s66 = sphi 0, %s52
      %s70 = sphi 0, %s70
      %s72 = sphi 0, %s70
      %s73 = sphi 0, %s72
      %s87 = sphi 0, %s73
      %s91 = sphi 0, %s91
      %s93 = sphi 0, %s91
      %s94 = sphi 0, %s93
      %s108 = sphi 0, %s94
      %s112 = sphi 0, %s112
      %s114 = sphi 0, %s112
      %s115 = sphi 0, %s114
      %s129 = sphi 0, %s115
      %s133 = sphi 0, %s133
      %s135 = sphi 0, %s133
      %s136 = sphi 0, %s135
      %s150 = sphi 0, %s136
      %s154 = sphi 0, %s154
      %s156 = sphi 0, %s154
      %s157 = sphi 0, %s156
      %s171 = sphi 0, %s157
      %s177 = sphi 0, %s179
      %s180 = sphi 0, %s177
      %s181 = sphi 0, %s180
      %s197 = sphi 0, %s181
    $region4: #{tpu_custom_call.1} parent=1 // loop_header_branch
      %18 = sbr.rel (%p16) target = $region8
    $region5: #{tpu_custom_call.1} parent=1 // loop_body
      %s20 = ssub.s32 %s15, 1
      %s21 = ssub.s32 %s15, 2
      %s22 = sadd.s32 %s15, 1
      %s23 = ssub.s32 %s15, %s22
      %p24 = scmp.eq.s32.totalorder %s23, 0
      %s26 = sadd.s32 %s25, 1
      %s27 = scalar_select %p24, %s25, %s26
      %p30 = pneg %p24
      %p31 = scmp.eq.s32.totalorder %s15, 3
      %p32 = por %p30, %p31
      %p33 = scmp.ne.s32.totalorder %s25, %s28
      %p34 = scmp.eq.s32.totalorder %s15, 0
      %p35 = por %p33, %p34
      %p36 = scmp.ne.s32.totalorder %s25, %s28
      %p37 = scmp.eq.s32.totalorder %s20, 3
      %p38 = por %p36, %p37
      %p39 = scmp.ne.s32.totalorder %s28, %s29
      %p40 = scmp.eq.s32.totalorder %s20, 0
      %p41 = por %p39, %p40
      %p42 = scmp.ne.s32.totalorder %s28, %s29
      %p43 = scmp.eq.s32.totalorder %s21, 3
      %p44 = por %p42, %p43
      %p46 = scmp.ne.s32.totalorder %s29, %s45
      %p47 = scmp.eq.s32.totalorder %s21, 0
      %p48 = por %p46, %p47
      %s50 = sadd.s32 %s49, 1
      %p53 = scmp.eq.s32.totalorder %s15, 3
      %p54 = scmp.ne.s32.totalorder %s49, %s51
      %p55 = scmp.eq.s32.totalorder %s15, 0
      %p56 = por %p54, %p55
      %p57 = scmp.ne.s32.totalorder %s49, %s51
      %p58 = scmp.eq.s32.totalorder %s20, 3
      %p59 = por %p57, %p58
      %p60 = scmp.ne.s32.totalorder %s51, %s52
      %p61 = scmp.eq.s32.totalorder %s20, 0
      %p62 = por %p60, %p61
      %p63 = scmp.ne.s32.totalorder %s51, %s52
      %p64 = scmp.eq.s32.totalorder %s21, 3
      %p65 = por %p63, %p64
      %p67 = scmp.ne.s32.totalorder %s52, %s66
      %p68 = scmp.eq.s32.totalorder %s21, 0
      %p69 = por %p67, %p68
      %s71 = sadd.s32 %s70, 1
      %p74 = scmp.eq.s32.totalorder %s15, 3
      %p75 = scmp.ne.s32.totalorder %s70, %s72
      %p76 = scmp.eq.s32.totalorder %s15, 0
      %p77 = por %p75, %p76
      %p78 = scmp.ne.s32.totalorder %s70, %s72
      %p79 = scmp.eq.s32.totalorder %s20, 3
      %p80 = por %p78, %p79
      %p81 = scmp.ne.s32.totalorder %s72, %s73
      %p82 = scmp.eq.s32.totalorder %s20, 0
      %p83 = por %p81, %p82
      %p84 = scmp.ne.s32.totalorder %s72, %s73
      %p85 = scmp.eq.s32.totalorder %s21, 3
      %p86 = por %p84, %p85
      %p88 = scmp.ne.s32.totalorder %s73, %s87
      %p89 = scmp.eq.s32.totalorder %s21, 0
      %p90 = por %p88, %p89
      %s92 = sadd.s32 %s91, 1
      %p95 = scmp.eq.s32.totalorder %s15, 3
      %p96 = scmp.ne.s32.totalorder %s91, %s93
      %p97 = scmp.eq.s32.totalorder %s15, 0
      %p98 = por %p96, %p97
      %p99 = scmp.ne.s32.totalorder %s91, %s93
      %p100 = scmp.eq.s32.totalorder %s20, 3
      %p101 = por %p99, %p100
      %p102 = scmp.ne.s32.totalorder %s93, %s94
      %p103 = scmp.eq.s32.totalorder %s20, 0
      %p104 = por %p102, %p103
      %p105 = scmp.ne.s32.totalorder %s93, %s94
      %p106 = scmp.eq.s32.totalorder %s21, 3
      %p107 = por %p105, %p106
      %p109 = scmp.ne.s32.totalorder %s94, %s108
      %p110 = scmp.eq.s32.totalorder %s21, 0
      %p111 = por %p109, %p110
      %s113 = sadd.s32 %s112, 1
      %p116 = scmp.eq.s32.totalorder %s15, 3
      %p117 = scmp.ne.s32.totalorder %s112, %s114
      %p118 = scmp.eq.s32.totalorder %s15, 0
      %p119 = por %p117, %p118
      %p120 = scmp.ne.s32.totalorder %s112, %s114
      %p121 = scmp.eq.s32.totalorder %s20, 3
      %p122 = por %p120, %p121
      %p123 = scmp.ne.s32.totalorder %s114, %s115
      %p124 = scmp.eq.s32.totalorder %s20, 0
      %p125 = por %p123, %p124
      %p126 = scmp.ne.s32.totalorder %s114, %s115
      %p127 = scmp.eq.s32.totalorder %s21, 3
      %p128 = por %p126, %p127
      %p130 = scmp.ne.s32.totalorder %s115, %s129
      %p131 = scmp.eq.s32.totalorder %s21, 0
      %p132 = por %p130, %p131
      %s134 = sadd.s32 %s133, 1
      %p137 = scmp.eq.s32.totalorder %s15, 3
      %p138 = scmp.ne.s32.totalorder %s133, %s135
      %p139 = scmp.eq.s32.totalorder %s15, 0
      %p140 = por %p138, %p139
      %p141 = scmp.ne.s32.totalorder %s133, %s135
      %p142 = scmp.eq.s32.totalorder %s20, 3
      %p143 = por %p141, %p142
      %p144 = scmp.ne.s32.totalorder %s135, %s136
      %p145 = scmp.eq.s32.totalorder %s20, 0
      %p146 = por %p144, %p145
      %p147 = scmp.ne.s32.totalorder %s135, %s136
      %p148 = scmp.eq.s32.totalorder %s21, 3
      %p149 = por %p147, %p148
      %p151 = scmp.ne.s32.totalorder %s136, %s150
      %p152 = scmp.eq.s32.totalorder %s21, 0
      %p153 = por %p151, %p152
      %s155 = sadd.s32 %s154, 1
      %p158 = scmp.eq.s32.totalorder %s15, 3
      %p159 = scmp.ne.s32.totalorder %s154, %s156
      %p160 = scmp.eq.s32.totalorder %s15, 0
      %p161 = por %p159, %p160
      %p162 = scmp.ne.s32.totalorder %s154, %s156
      %p163 = scmp.eq.s32.totalorder %s20, 3
      %p164 = por %p162, %p163
      %p165 = scmp.ne.s32.totalorder %s156, %s157
      %p166 = scmp.eq.s32.totalorder %s20, 0
      %p167 = por %p165, %p166
      %p168 = scmp.ne.s32.totalorder %s156, %s157
      %p169 = scmp.eq.s32.totalorder %s21, 3
      %p170 = por %p168, %p169
      %p172 = scmp.ne.s32.totalorder %s157, %s171
      %p173 = scmp.eq.s32.totalorder %s21, 0
      %p174 = por %p172, %p173
      %s175 = ssub.s32 %s15, %s22
      %p176 = scmp.eq.s32.totalorder %s175, 0
      %s178 = sadd.s32 %s177, 1
      %s179 = scalar_select %p176, %s177, %s178
      %p182 = pneg %p176
      %p183 = scmp.eq.s32.totalorder %s15, 3
      %p184 = por %p182, %p183
      %p185 = scmp.ne.s32.totalorder %s177, %s180
      %p186 = scmp.eq.s32.totalorder %s15, 0
      %p187 = por %p185, %p186
      %p188 = scmp.ne.s32.totalorder %s177, %s180
      %p189 = scmp.eq.s32.totalorder %s20, 3
      %p190 = por %p188, %p189
      %p191 = scmp.ne.s32.totalorder %s180, %s181
      %p192 = scmp.eq.s32.totalorder %s20, 0
      %p193 = por %p191, %p192
      %p194 = scmp.ne.s32.totalorder %s180, %s181
      %p195 = scmp.eq.s32.totalorder %s21, 3
      %p196 = por %p194, %p195
      %p198 = scmp.ne.s32.totalorder %s181, %s197
      %p199 = scmp.eq.s32.totalorder %s21, 0
      %p200 = por %p198, %p199
      %p201 = scmp.le.s32.totalorder 1, %s15
      %p202 = scmp.lt.s32.totalorder %s15, 5
      %p203 = pnand %p201, %p202
      %p204 = pneg %p203
      // Predicated region
      $region9: #{tpu_custom_call.1} parent=5 // pred_check
        _
      $region10: #{tpu_custom_call.1} parent=5 // pred_check_branch
        %206 = sbr.rel (%p203) target = $region12
      $region11: #{tpu_custom_call.1} parent=5 // pred_region
        %s207 = ssub.s32 %s15, 1
        // Predicated region
        $region13: #{tpu_custom_call.1} parent=11 // pred_check
          %p208 = pneg %p62
        $region14: #{tpu_custom_call.1} parent=11 // pred_check_branch
          %210 = sbr.rel (%p208) target = $region16
        $region15: #{tpu_custom_call.1} parent=11 // pred_region
          %s212 = ssub.s32 2048, 2048
          %213 = vsyncadd [#allocation3], %s212
          %s214 = sshll.u32 [#allocation2], 4
          %s215 = int_to_ptr.vmem [resolvable:$true] %s214
          %220 = dma.hbm_to_vmem [thread:$0]  %s1, 2048, %s215, [#allocation3], 128, 128, 8
        $region16: #{tpu_custom_call.1} parent=11 // pred_fallthru
          _
        // Predicated region
        $region17: #{tpu_custom_call.1} parent=11 // pred_check
          %p221 = pneg %p83
        $region18: #{tpu_custom_call.1} parent=11 // pred_check_branch
          %223 = sbr.rel (%p221) target = $region20
        $region19: #{tpu_custom_call.1} parent=11 // pred_region
          _
        $region20: #{tpu_custom_call.1} parent=11 // pred_fallthru
          _
        // Predicated region
        $region21: #{tpu_custom_call.1} parent=11 // pred_check
          %p224 = pneg %p104
        $region22: #{tpu_custom_call.1} parent=11 // pred_check_branch
          %226 = sbr.rel (%p224) target = $region24
        $region23: #{tpu_custom_call.1} parent=11 // pred_region
          %s228 = ssub.s32 4096, 4096
          %229 = vsyncadd [#allocation5], %s228
          %s230 = sshll.u32 [#allocation4], 4
          %s231 = int_to_ptr.vmem [resolvable:$true] %s230
          %236 = dma.hbm_to_vmem [thread:$0]  %s3, 4096, %s231, [#allocation5], 128, 128, 8
        $region24: #{tpu_custom_call.1} parent=11 // pred_fallthru
          _
        // Predicated region
        $region25: #{tpu_custom_call.1} parent=11 // pred_check
          %p237 = pneg %p125
        $region26: #{tpu_custom_call.1} parent=11 // pred_check_branch
          %239 = sbr.rel (%p237) target = $region28
        $region27: #{tpu_custom_call.1} parent=11 // pred_region
          _
        $region28: #{tpu_custom_call.1} parent=11 // pred_fallthru
          _
        // Predicated region
        $region29: #{tpu_custom_call.1} parent=11 // pred_check
          %p240 = pneg %p146
        $region30: #{tpu_custom_call.1} parent=11 // pred_check_branch
          %242 = sbr.rel (%p240) target = $region32
        $region31: #{tpu_custom_call.1} parent=11 // pred_region
          _
        $region32: #{tpu_custom_call.1} parent=11 // pred_fallthru
          _
        // Predicated region
        $region33: #{tpu_custom_call.1} parent=11 // pred_check
          %p243 = pneg %p167
        $region34: #{tpu_custom_call.1} parent=11 // pred_check_branch
          %245 = sbr.rel (%p243) target = $region36
        $region35: #{tpu_custom_call.1} parent=11 // pred_region
          _
        $region36: #{tpu_custom_call.1} parent=11 // pred_fallthru
          _
      $region12: #{tpu_custom_call.1} parent=5 // pred_fallthru
        _
      %p246 = scmp.lt.s32.totalorder %s15, 4
      // Predicated region
      $region37: #{tpu_custom_call.1} parent=5 // pred_check
        %p247 = pneg %p246
      $region38: #{tpu_custom_call.1} parent=5 // pred_check_branch
        %249 = sbr.rel (%p247) target = $region40
      $region39: #{tpu_custom_call.1} parent=5 // pred_region
        // Predicated region
        $region41: #{tpu_custom_call.1} parent=39 // pred_check
          %p250 = pneg %p35
        $region42: #{tpu_custom_call.1} parent=39 // pred_check_branch
          %252 = sbr.rel (%p250) target = $region44
        $region43: #{tpu_custom_call.1} parent=39 // pred_region
          %s253 = smul.u32 4, %s15
          %p254 = scmp.lt.s32.totalorder %s253, 15
          %s255 = scalar_select %p254, %s253, 15
          %s256 = smul.addr %s255, 8
          %s257 = scalar_lea.vmem %s0, %s256
          %s258 = smul.u32 4, %s15
        $region44: #{tpu_custom_call.1} parent=39 // pred_fallthru
          _
      $region40: #{tpu_custom_call.1} parent=5 // pred_fallthru
        _
      %p259 = scmp.le.s32.totalorder 1, %s15
      %p260 = scmp.lt.s32.totalorder %s15, 5
      %p261 = pnand %p259, %p260
      %p262 = pneg %p261
      // Predicated region
      $region45: #{tpu_custom_call.1} parent=5 // pred_check
        _
      $region46: #{tpu_custom_call.1} parent=5 // pred_check_branch
        %264 = sbr.rel (%p261) target = $region48
      $region47: #{tpu_custom_call.1} parent=5 // pred_region
        %s265 = ssub.s32 %s15, 1
        // Predicated region
        $region49: #{tpu_custom_call.1} parent=47 // pred_check
          %p266 = pneg %p62
        $region50: #{tpu_custom_call.1} parent=47 // pred_check_branch
          %268 = sbr.rel (%p266) target = $region52
        $region51: #{tpu_custom_call.1} parent=47 // pred_region
          %269 = dma.done [#allocation3], 2048
        $region52: #{tpu_custom_call.1} parent=47 // pred_fallthru
          _
        // Predicated region
        $region53: #{tpu_custom_call.1} parent=47 // pred_check
          %p270 = pneg %p104
        $region54: #{tpu_custom_call.1} parent=47 // pred_check_branch
          %272 = sbr.rel (%p270) target = $region56
        $region55: #{tpu_custom_call.1} parent=47 // pred_region
          %273 = dma.done [#allocation5], 4096
        $region56: #{tpu_custom_call.1} parent=47 // pred_fallthru
          _
        %s274 = smul.u32 4, %s20
        %p275 = scmp.lt.s32.totalorder %s274, 15
        %s276 = scalar_select %p275, %s274, 15
        %s277 = smul.addr %s276, 8
        %s278 = scalar_lea.vmem %s0, %s277
        %p279 = pneg %p41
        %p280 = pneg %p38
        %p281 = pneg %p62
        %p282 = pneg %p59
        %p283 = pneg %p83
        %p284 = pneg %p80
        %p285 = pneg %p104
        %p286 = pneg %p101
        %p287 = pneg %p125
        %p288 = pneg %p122
        %p289 = pneg %p146
        %p290 = pneg %p143
        %p291 = pneg %p167
        %p292 = pneg %p164
        %p293 = pneg %p193
        %p294 = pneg %p190
        %s295 = smul.u32 4, %s20
        %p296 = scmp.lt.s32.totalorder %s295, 15
        %s297 = scalar_select %p296, %s295, 15
        %s298 = smul.addr %s297, 8
        %s299 = scalar_lea.vmem %s7, %s298
        %s300 = smul.u32 4, %s20
        %p301 = scmp.lt.s32.totalorder %s300, 15
        %s302 = scalar_select %p301, %s300, 15
        %s303 = smul.addr %s302, 8
        %s304 = scalar_lea.vmem %s0, %s303
        %s305 = smul.u32 4, %s20
        %s306 = smul.u32 4, %s20
        %p307 = scmp.lt.s32.totalorder %s306, 15
        %s308 = scalar_select %p307, %s306, 15
        %s309 = smul.addr %s308, 8
        %s310 = scalar_lea.vmem %s7, %s309
        %s311 = smul.u32 4, %s20
        %v313 = vld [vmem:[%s304] sm:$0xff]
        %v314 = vld [vmem:[%s304 + $0x8] sm:$0xff]
        %v315 = vld [vmem:[%s304 + $0x10] sm:$0xff]
        %v316 = vld [vmem:[%s304 + $0x18] sm:$0xff]
        %v317 = vpack.c.bf16 %v314, %v313
        %v318 = vpack.c.bf16 %v316, %v315
        %v319 = vld [vmem:[#allocation2] sm:$0xff]
        %v320 = vld [vmem:[#allocation2 + $0x8] sm:$0xff]
        %v321 = vld [vmem:[#allocation2 + $0x10] sm:$0xff]
        %v322 = vld [vmem:[#allocation2 + $0x18] sm:$0xff]
        %v323 = vld [vmem:[#allocation2 + $0x20] sm:$0xff]
        %v324 = vld [vmem:[#allocation2 + $0x28] sm:$0xff]
        %v325 = vld [vmem:[#allocation2 + $0x30] sm:$0xff]
        %v326 = vld [vmem:[#allocation2 + $0x38] sm:$0xff]
        %v327 = vld [vmem:[#allocation2 + $0x40] sm:$0xff]
        %v328 = vld [vmem:[#allocation2 + $0x48] sm:$0xff]
        %v329 = vld [vmem:[#allocation2 + $0x50] sm:$0xff]
        %v330 = vld [vmem:[#allocation2 + $0x58] sm:$0xff]
        %v331 = vld [vmem:[#allocation2 + $0x60] sm:$0xff]
        %v332 = vld [vmem:[#allocation2 + $0x68] sm:$0xff]
        %v333 = vld [vmem:[#allocation2 + $0x70] sm:$0xff]
        %v334 = vld [vmem:[#allocation2 + $0x78] sm:$0xff]
        %v335 = vld [vmem:[%s2] sm:$0x3]
        %v337 = vlaneseq
        %v338 = vshrl.u32 %v337, 7
        %v339 = vsub.s32 0, %v338
        %v340 = vrot.slane %v335, %v339
        %v341 = vlaneseq
        %v342 = vshrl.u32 %v341, 7
        %v343 = vsub.s32 1, %v342
        %v344 = vrot.slane %v335, %v343
        %v363 = vunpack.c.l.b16 %v319
        %v364 = vunpack.c.h.b16 %v319
        %v365 = vunpack.c.l.b16 %v320
        %v366 = vunpack.c.h.b16 %v320
        %v367 = vunpack.c.l.b16 %v321
        %v368 = vunpack.c.h.b16 %v321
        %v369 = vunpack.c.l.b16 %v322
        %v370 = vunpack.c.h.b16 %v322
        %v371 = vunpack.c.l.b16 %v323
        %v372 = vunpack.c.h.b16 %v323
        %v373 = vunpack.c.l.b16 %v324
        %v374 = vunpack.c.h.b16 %v324
        %v375 = vunpack.c.l.b16 %v325
        %v376 = vunpack.c.h.b16 %v325
        %v377 = vunpack.c.l.b16 %v326
        %v378 = vunpack.c.h.b16 %v326
        %v379 = vunpack.c.l.b16 %v327
        %v380 = vunpack.c.h.b16 %v327
        %v381 = vunpack.c.l.b16 %v328
        %v382 = vunpack.c.h.b16 %v328
        %v383 = vunpack.c.l.b16 %v329
        %v384 = vunpack.c.h.b16 %v329
        %v385 = vunpack.c.l.b16 %v330
        %v386 = vunpack.c.h.b16 %v330
        %v387 = vunpack.c.l.b16 %v331
        %v388 = vunpack.c.h.b16 %v331
        %v389 = vunpack.c.l.b16 %v332
        %v390 = vunpack.c.h.b16 %v332
        %v391 = vunpack.c.l.b16 %v333
        %v392 = vunpack.c.h.b16 %v333
        %v393 = vunpack.c.l.b16 %v334
        %v394 = vunpack.c.h.b16 %v334
        %v395 = vpack.c.b16 %v365, %v363
        %v396 = vpack.c.b16 %v366, %v364
        %v397 = vpack.c.b16 %v369, %v367
        %v398 = vpack.c.b16 %v370, %v368
        %v399 = vpack.c.b16 %v373, %v371
        %v400 = vpack.c.b16 %v374, %v372
        %v401 = vpack.c.b16 %v377, %v375
        %v402 = vpack.c.b16 %v378, %v376
        %v403 = vpack.c.b16 %v381, %v379
        %v404 = vpack.c.b16 %v382, %v380
        %v405 = vpack.c.b16 %v385, %v383
        %v406 = vpack.c.b16 %v386, %v384
        %v407 = vpack.c.b16 %v389, %v387
        %v408 = vpack.c.b16 %v390, %v388
        %v409 = vpack.c.b16 %v393, %v391
        %v410 = vpack.c.b16 %v394, %v392
        %427 = vmatprep.subr.bf16.mxu0 %v396
        %428 = vmatpush1.bf16.msra.mxu0 %v395
        %429 = vmatprep.subr.bf16.mxu0 %v398
        %430 = vmatpush1.bf16.msra.mxu0 %v397
        %431 = vmatprep.subr.bf16.mxu0 %v400
        %432 = vmatpush1.bf16.msra.mxu0 %v399
        %433 = vmatprep.subr.bf16.mxu0 %v402
        %434 = vmatpush1.bf16.msra.mxu0 %v401
        %435 = vmatprep.subr.bf16.mxu0 %v404
        %436 = vmatpush1.bf16.msra.mxu0 %v403
        %437 = vmatprep.subr.bf16.mxu0 %v406
        %438 = vmatpush1.bf16.msra.mxu0 %v405
        %439 = vmatprep.subr.bf16.mxu0 %v408
        %440 = vmatpush1.bf16.msra.mxu0 %v407
        %441 = vmatprep.subr.bf16.mxu0 %v410
        %442 = vmatpush1.bf16.msra.mxu0 %v409
        %443 = vmatprep.subr.bf16.mxu0 0
        %444 = vmatpush1.bf16.msra.mxu0 0
        %445 = vmatprep.subr.bf16.mxu0 0
        %446 = vmatpush1.bf16.msra.mxu0 0
        %447 = vmatprep.subr.bf16.mxu0 0
        %448 = vmatpush1.bf16.msra.mxu0 0
        %449 = vmatprep.subr.bf16.mxu0 0
        %450 = vmatpush1.bf16.msra.mxu0 0
        %451 = vmatprep.subr.bf16.mxu0 0
        %452 = vmatpush1.bf16.msra.mxu0 0
        %453 = vmatprep.subr.bf16.mxu0 0
        %454 = vmatpush1.bf16.msra.mxu0 0
        %455 = vmatprep.subr.bf16.mxu0 0
        %456 = vmatpush1.bf16.msra.mxu0 0
        %457 = vmatprep.subr.bf16.mxu0 0
        %458 = vmatpush1.bf16.msra.mxu0 0
        %459 = vmatprep.mubr.bf16.mxu0 0
        %460 = vmatmul.mubr.bf16.gmra.mrb[0].mxu0 %v317
        %v461 = vpop.f32.mrb[0].mxu0
        %v462 = vadd.f32 %v340, %v461
        %v463 = vpop.f32.mrb[0].mxu0
        %v464 = vadd.f32 %v344, %v463
        %v465 = vpop.f32.mrb[0].mxu0
        %v466 = vadd.f32 %v340, %v465
        %v467 = vpop.f32.mrb[0].mxu0
        %v468 = vadd.f32 %v344, %v467
        %469 = vmatprep.mubr.bf16.mxu0 0
        %470 = vmatmul.mubr.bf16.gmra.mrb[0].mxu0 %v318
        %v471 = vpop.f32.mrb[0].mxu0
        %v472 = vadd.f32 %v340, %v471
        %v473 = vpop.f32.mrb[0].mxu0
        %v474 = vadd.f32 %v344, %v473
        %v475 = vpop.f32.mrb[0].mxu0
        %v476 = vadd.f32 %v340, %v475
        %v477 = vpop.f32.mrb[0].mxu0
        %v478 = vadd.f32 %v344, %v477
        %479 = vdwg.mxu0
        %v480 = vmax.f32 %v462, 0.0
        %v481 = vmax.f32 %v464, 0.0
        %v482 = vmax.f32 %v466, 0.0
        %v483 = vmax.f32 %v468, 0.0
        %v484 = vmax.f32 %v472, 0.0
        %v485 = vmax.f32 %v474, 0.0
        %v486 = vmax.f32 %v476, 0.0
        %v487 = vmax.f32 %v478, 0.0
        %v488 = vpack.c.bf16 %v482, %v480
        %v489 = vpack.c.bf16 %v483, %v481
        %v490 = vpack.c.bf16 %v486, %v484
        %v491 = vpack.c.bf16 %v487, %v485
        %v492 = vld [vmem:[#allocation4] sm:$0xff]
        %v493 = vld [vmem:[#allocation4 + $0x8] sm:$0xff]
        %v494 = vld [vmem:[#allocation4 + $0x10] sm:$0xff]
        %v495 = vld [vmem:[#allocation4 + $0x18] sm:$0xff]
        %v496 = vld [vmem:[#allocation4 + $0x20] sm:$0xff]
        %v497 = vld [vmem:[#allocation4 + $0x28] sm:$0xff]
        %v498 = vld [vmem:[#allocation4 + $0x30] sm:$0xff]
        %v499 = vld [vmem:[#allocation4 + $0x38] sm:$0xff]
        %v500 = vld [vmem:[#allocation4 + $0x40] sm:$0xff]
        %v501 = vld [vmem:[#allocation4 + $0x48] sm:$0xff]
        %v502 = vld [vmem:[#allocation4 + $0x50] sm:$0xff]
        %v503 = vld [vmem:[#allocation4 + $0x58] sm:$0xff]
        %v504 = vld [vmem:[#allocation4 + $0x60] sm:$0xff]
        %v505 = vld [vmem:[#allocation4 + $0x68] sm:$0xff]
        %v506 = vld [vmem:[#allocation4 + $0x70] sm:$0xff]
        %v507 = vld [vmem:[#allocation4 + $0x78] sm:$0xff]
        %v508 = vld [vmem:[#allocation4 + $0x80] sm:$0xff]
        %v509 = vld [vmem:[#allocation4 + $0x88] sm:$0xff]
        %v510 = vld [vmem:[#allocation4 + $0x90] sm:$0xff]
        %v511 = vld [vmem:[#allocation4 + $0x98] sm:$0xff]
        %v512 = vld [vmem:[#allocation4 + $0xa0] sm:$0xff]
        %v513 = vld [vmem:[#allocation4 + $0xa8] sm:$0xff]
        %v514 = vld [vmem:[#allocation4 + $0xb0] sm:$0xff]
        %v515 = vld [vmem:[#allocation4 + $0xb8] sm:$0xff]
        %v516 = vld [vmem:[#allocation4 + $0xc0] sm:$0xff]
        %v517 = vld [vmem:[#allocation4 + $0xc8] sm:$0xff]
        %v518 = vld [vmem:[#allocation4 + $0xd0] sm:$0xff]
        %v519 = vld [vmem:[#allocation4 + $0xd8] sm:$0xff]
        %v520 = vld [vmem:[#allocation4 + $0xe0] sm:$0xff]
        %v521 = vld [vmem:[#allocation4 + $0xe8] sm:$0xff]
        %v522 = vld [vmem:[#allocation4 + $0xf0] sm:$0xff]
        %v523 = vld [vmem:[#allocation4 + $0xf8] sm:$0xff]
        %v524 = vld [vmem:[%s4] sm:$0x3]
        %v526 = vlaneseq
        %v527 = vshrl.u32 %v526, 7
        %v528 = vsub.s32 0, %v527
        %v529 = vrot.slane %v524, %v528
        %v530 = vlaneseq
        %v531 = vshrl.u32 %v530, 7
        %v532 = vsub.s32 1, %v531
        %v533 = vrot.slane %v524, %v532
        %v568 = vunpack.c.l.b16 %v492
        %v569 = vunpack.c.h.b16 %v492
        %v570 = vunpack.c.l.b16 %v493
        %v571 = vunpack.c.h.b16 %v493
        %v572 = vunpack.c.l.b16 %v494
        %v573 = vunpack.c.h.b16 %v494
        %v574 = vunpack.c.l.b16 %v495
        %v575 = vunpack.c.h.b16 %v495
        %v576 = vunpack.c.l.b16 %v496
        %v577 = vunpack.c.h.b16 %v496
        %v578 = vunpack.c.l.b16 %v497
        %v579 = vunpack.c.h.b16 %v497
        %v580 = vunpack.c.l.b16 %v498
        %v581 = vunpack.c.h.b16 %v498
        %v582 = vunpack.c.l.b16 %v499
        %v583 = vunpack.c.h.b16 %v499
        %v584 = vunpack.c.l.b16 %v500
        %v585 = vunpack.c.h.b16 %v500
        %v586 = vunpack.c.l.b16 %v501
        %v587 = vunpack.c.h.b16 %v501
        %v588 = vunpack.c.l.b16 %v502
        %v589 = vunpack.c.h.b16 %v502
        %v590 = vunpack.c.l.b16 %v503
        %v591 = vunpack.c.h.b16 %v503
        %v592 = vunpack.c.l.b16 %v504
        %v593 = vunpack.c.h.b16 %v504
        %v594 = vunpack.c.l.b16 %v505
        %v595 = vunpack.c.h.b16 %v505
        %v596 = vunpack.c.l.b16 %v506
        %v597 = vunpack.c.h.b16 %v506
        %v598 = vunpack.c.l.b16 %v507
        %v599 = vunpack.c.h.b16 %v507
        %v600 = vunpack.c.l.b16 %v508
        %v601 = vunpack.c.h.b16 %v508
        %v602 = vunpack.c.l.b16 %v509
        %v603 = vunpack.c.h.b16 %v509
        %v604 = vunpack.c.l.b16 %v510
        %v605 = vunpack.c.h.b16 %v510
        %v606 = vunpack.c.l.b16 %v511
        %v607 = vunpack.c.h.b16 %v511
        %v608 = vunpack.c.l.b16 %v512
        %v609 = vunpack.c.h.b16 %v512
        %v610 = vunpack.c.l.b16 %v513
        %v611 = vunpack.c.h.b16 %v513
        %v612 = vunpack.c.l.b16 %v514
        %v613 = vunpack.c.h.b16 %v514
        %v614 = vunpack.c.l.b16 %v515
        %v615 = vunpack.c.h.b16 %v515
        %v616 = vunpack.c.l.b16 %v516
        %v617 = vunpack.c.h.b16 %v516
        %v618 = vunpack.c.l.b16 %v517
        %v619 = vunpack.c.h.b16 %v517
        %v620 = vunpack.c.l.b16 %v518
        %v621 = vunpack.c.h.b16 %v518
        %v622 = vunpack.c.l.b16 %v519
        %v623 = vunpack.c.h.b16 %v519
        %v624 = vunpack.c.l.b16 %v520
        %v625 = vunpack.c.h.b16 %v520
        %v626 = vunpack.c.l.b16 %v521
        %v627 = vunpack.c.h.b16 %v521
        %v628 = vunpack.c.l.b16 %v522
        %v629 = vunpack.c.h.b16 %v522
        %v630 = vunpack.c.l.b16 %v523
        %v631 = vunpack.c.h.b16 %v523
        %v632 = vpack.c.b16 %v570, %v568
        %v633 = vpack.c.b16 %v571, %v569
        %v634 = vpack.c.b16 %v574, %v572
        %v635 = vpack.c.b16 %v575, %v573
        %v636 = vpack.c.b16 %v578, %v576
        %v637 = vpack.c.b16 %v579, %v577
        %v638 = vpack.c.b16 %v582, %v580
        %v639 = vpack.c.b16 %v583, %v581
        %v640 = vpack.c.b16 %v586, %v584
        %v641 = vpack.c.b16 %v587, %v585
        %v642 = vpack.c.b16 %v590, %v588
        %v643 = vpack.c.b16 %v591, %v589
        %v644 = vpack.c.b16 %v594, %v592
        %v645 = vpack.c.b16 %v595, %v593
        %v646 = vpack.c.b16 %v598, %v596
        %v647 = vpack.c.b16 %v599, %v597
        %v648 = vpack.c.b16 %v602, %v600
        %v649 = vpack.c.b16 %v603, %v601
        %v650 = vpack.c.b16 %v606, %v604
        %v651 = vpack.c.b16 %v607, %v605
        %v652 = vpack.c.b16 %v610, %v608
        %v653 = vpack.c.b16 %v611, %v609
        %v654 = vpack.c.b16 %v614, %v612
        %v655 = vpack.c.b16 %v615, %v613
        %v656 = vpack.c.b16 %v618, %v616
        %v657 = vpack.c.b16 %v619, %v617
        %v658 = vpack.c.b16 %v622, %v620
        %v659 = vpack.c.b16 %v623, %v621
        %v660 = vpack.c.b16 %v626, %v624
        %v661 = vpack.c.b16 %v627, %v625
        %v662 = vpack.c.b16 %v630, %v628
        %v663 = vpack.c.b16 %v631, %v629
        %696 = vmatprep.subr.bf16.mxu0 %v633
        %697 = vmatpush1.bf16.msra.mxu0 %v632
        %698 = vmatprep.subr.bf16.mxu0 %v635
        %699 = vmatpush1.bf16.msra.mxu0 %v634
        %700 = vmatprep.subr.bf16.mxu0 %v637
        %701 = vmatpush1.bf16.msra.mxu0 %v636
        %702 = vmatprep.subr.bf16.mxu0 %v639
        %703 = vmatpush1.bf16.msra.mxu0 %v638
        %704 = vmatprep.subr.bf16.mxu0 %v641
        %705 = vmatpush1.bf16.msra.mxu0 %v640
        %706 = vmatprep.subr.bf16.mxu0 %v643
        %707 = vmatpush1.bf16.msra.mxu0 %v642
        %708 = vmatprep.subr.bf16.mxu0 %v645
        %709 = vmatpush1.bf16.msra.mxu0 %v644
        %710 = vmatprep.subr.bf16.mxu0 %v647
        %711 = vmatpush1.bf16.msra.mxu0 %v646
        %712 = vmatprep.subr.bf16.mxu0 %v649
        %713 = vmatpush1.bf16.msra.mxu0 %v648
        %714 = vmatprep.subr.bf16.mxu0 %v651
        %715 = vmatpush1.bf16.msra.mxu0 %v650
        %716 = vmatprep.subr.bf16.mxu0 %v653
        %717 = vmatpush1.bf16.msra.mxu0 %v652
        %718 = vmatprep.subr.bf16.mxu0 %v655
        %719 = vmatpush1.bf16.msra.mxu0 %v654
        %720 = vmatprep.subr.bf16.mxu0 %v657
        %721 = vmatpush1.bf16.msra.mxu0 %v656
        %722 = vmatprep.subr.bf16.mxu0 %v659
        %723 = vmatpush1.bf16.msra.mxu0 %v658
        %724 = vmatprep.subr.bf16.mxu0 %v661
        %725 = vmatpush1.bf16.msra.mxu0 %v660
        %726 = vmatprep.subr.bf16.mxu0 %v663
        %727 = vmatpush1.bf16.msra.mxu0 %v662
        %728 = vmatprep.mubr.bf16.mxu0 %v489
        %729 = vmatmul.mubr.bf16.gmra.mrb[0].mxu0 %v488
        %v730 = vpop.f32.mrb[0].mxu0
        %v731 = vadd.f32 %v529, %v730
        %v732 = vpop.f32.mrb[0].mxu0
        %v733 = vadd.f32 %v533, %v732
        %v734 = vpop.f32.mrb[0].mxu0
        %v735 = vadd.f32 %v529, %v734
        %v736 = vpop.f32.mrb[0].mxu0
        %v737 = vadd.f32 %v533, %v736
        %738 = vmatprep.mubr.bf16.mxu0 %v491
        %739 = vmatmul.mubr.bf16.gmra.mrb[0].mxu0 %v490
        %v740 = vpop.f32.mrb[0].mxu0
        %v741 = vadd.f32 %v529, %v740
        %v742 = vpop.f32.mrb[0].mxu0
        %v743 = vadd.f32 %v533, %v742
        %v744 = vpop.f32.mrb[0].mxu0
        %v745 = vadd.f32 %v529, %v744
        %v746 = vpop.f32.mrb[0].mxu0
        %v747 = vadd.f32 %v533, %v746
        %748 = vdwg.mxu0
        %v749 = vmax.f32 %v731, 0.0
        %v750 = vmax.f32 %v733, 0.0
        %v751 = vmax.f32 %v735, 0.0
        %v752 = vmax.f32 %v737, 0.0
        %v753 = vmax.f32 %v741, 0.0
        %v754 = vmax.f32 %v743, 0.0
        %v755 = vmax.f32 %v745, 0.0
        %v756 = vmax.f32 %v747, 0.0
        %v757 = vpack.c.bf16 %v751, %v749
        %v758 = vpack.c.bf16 %v752, %v750
        %v759 = vpack.c.bf16 %v755, %v753
        %v760 = vpack.c.bf16 %v756, %v754
        %v761 = vld [vmem:[%s5] sm:$0xf]
        %v762 = vld [vmem:[%s5 + $0x4] sm:$0xf]
        %v763 = vld [vmem:[%s5 + $0x8] sm:$0xf]
        %v764 = vld [vmem:[%s5 + $0xc] sm:$0xf]
        %v765 = vld [vmem:[%s5 + $0x10] sm:$0xf]
        %v766 = vld [vmem:[%s5 + $0x14] sm:$0xf]
        %v767 = vld [vmem:[%s5 + $0x18] sm:$0xf]
        %v768 = vld [vmem:[%s5 + $0x1c] sm:$0xf]
        %v769 = vld [vmem:[%s5 + $0x20] sm:$0xf]
        %v770 = vld [vmem:[%s5 + $0x24] sm:$0xf]
        %v771 = vld [vmem:[%s5 + $0x28] sm:$0xf]
        %v772 = vld [vmem:[%s5 + $0x2c] sm:$0xf]
        %v773 = vld [vmem:[%s5 + $0x30] sm:$0xf]
        %v774 = vld [vmem:[%s5 + $0x34] sm:$0xf]
        %v775 = vld [vmem:[%s5 + $0x38] sm:$0xf]
        %v776 = vld [vmem:[%s5 + $0x3c] sm:$0xf]
        %v777 = vld [vmem:[%s5 + $0x40] sm:$0xf]
        %v778 = vld [vmem:[%s5 + $0x44] sm:$0xf]
        %v779 = vld [vmem:[%s5 + $0x48] sm:$0xf]
        %v780 = vld [vmem:[%s5 + $0x4c] sm:$0xf]
        %v781 = vld [vmem:[%s5 + $0x50] sm:$0xf]
        %v782 = vld [vmem:[%s5 + $0x54] sm:$0xf]
        %v783 = vld [vmem:[%s5 + $0x58] sm:$0xf]
        %v784 = vld [vmem:[%s5 + $0x5c] sm:$0xf]
        %v785 = vld [vmem:[%s5 + $0x60] sm:$0xf]
        %v786 = vld [vmem:[%s5 + $0x64] sm:$0xf]
        %v787 = vld [vmem:[%s5 + $0x68] sm:$0xf]
        %v788 = vld [vmem:[%s5 + $0x6c] sm:$0xf]
        %v789 = vld [vmem:[%s5 + $0x70] sm:$0xf]
        %v790 = vld [vmem:[%s5 + $0x74] sm:$0xf]
        %v791 = vld [vmem:[%s5 + $0x78] sm:$0xf]
        %v792 = vld [vmem:[%s5 + $0x7c] sm:$0xf]
        %v793 = vld [vmem:[%s6] sm:$0x1]
        %v795 = vlaneseq
        %v796 = vshrl.u32 %v795, 7
        %v797 = vsub.s32 0, %v796
        %v798 = vrot.slane %v793, %v797
        %v832 = vunpack.c.l.b16 %v761
        %v833 = vunpack.c.l.b16 %v762
        %v834 = vunpack.c.l.b16 %v763
        %v835 = vunpack.c.l.b16 %v764
        %v836 = vunpack.c.l.b16 %v765
        %v837 = vunpack.c.l.b16 %v766
        %v838 = vunpack.c.l.b16 %v767
        %v839 = vunpack.c.l.b16 %v768
        %v840 = vunpack.c.l.b16 %v769
        %v841 = vunpack.c.l.b16 %v770
        %v842 = vunpack.c.l.b16 %v771
        %v843 = vunpack.c.l.b16 %v772
        %v844 = vunpack.c.l.b16 %v773
        %v845 = vunpack.c.l.b16 %v774
        %v846 = vunpack.c.l.b16 %v775
        %v847 = vunpack.c.l.b16 %v776
        %v848 = vunpack.c.l.b16 %v777
        %v849 = vunpack.c.l.b16 %v778
        %v850 = vunpack.c.l.b16 %v779
        %v851 = vunpack.c.l.b16 %v780
        %v852 = vunpack.c.l.b16 %v781
        %v853 = vunpack.c.l.b16 %v782
        %v854 = vunpack.c.l.b16 %v783
        %v855 = vunpack.c.l.b16 %v784
        %v856 = vunpack.c.l.b16 %v785
        %v857 = vunpack.c.l.b16 %v786
        %v858 = vunpack.c.l.b16 %v787
        %v859 = vunpack.c.l.b16 %v788
        %v860 = vunpack.c.l.b16 %v789
        %v861 = vunpack.c.l.b16 %v790
        %v862 = vunpack.c.l.b16 %v791
        %v863 = vunpack.c.l.b16 %v792
        %v864 = vpack.c.b16 %v833, %v832
        %v865 = vpack.c.b16 %v835, %v834
        %v866 = vpack.c.b16 %v837, %v836
        %v867 = vpack.c.b16 %v839, %v838
        %v868 = vpack.c.b16 %v841, %v840
        %v869 = vpack.c.b16 %v843, %v842
        %v870 = vpack.c.b16 %v845, %v844
        %v871 = vpack.c.b16 %v847, %v846
        %v872 = vpack.c.b16 %v849, %v848
        %v873 = vpack.c.b16 %v851, %v850
        %v874 = vpack.c.b16 %v853, %v852
        %v875 = vpack.c.b16 %v855, %v854
        %v876 = vpack.c.b16 %v857, %v856
        %v877 = vpack.c.b16 %v859, %v858
        %v878 = vpack.c.b16 %v861, %v860
        %v879 = vpack.c.b16 %v863, %v862
        %896 = vmatprep.subr.bf16.mxu0 0
        %897 = vmatpush1.bf16.msra.mxu0 %v864
        %898 = vmatprep.subr.bf16.mxu0 0
        %899 = vmatpush1.bf16.msra.mxu0 %v865
        %900 = vmatprep.subr.bf16.mxu0 0
        %901 = vmatpush1.bf16.msra.mxu0 %v866
        %902 = vmatprep.subr.bf16.mxu0 0
        %903 = vmatpush1.bf16.msra.mxu0 %v867
        %904 = vmatprep.subr.bf16.mxu0 0
        %905 = vmatpush1.bf16.msra.mxu0 %v868
        %906 = vmatprep.subr.bf16.mxu0 0
        %907 = vmatpush1.bf16.msra.mxu0 %v869
        %908 = vmatprep.subr.bf16.mxu0 0
        %909 = vmatpush1.bf16.msra.mxu0 %v870
        %910 = vmatprep.subr.bf16.mxu0 0
        %911 = vmatpush1.bf16.msra.mxu0 %v871
        %912 = vmatprep.subr.bf16.mxu0 0
        %913 = vmatpush1.bf16.msra.mxu0 %v872
        %914 = vmatprep.subr.bf16.mxu0 0
        %915 = vmatpush1.bf16.msra.mxu0 %v873
        %916 = vmatprep.subr.bf16.mxu0 0
        %917 = vmatpush1.bf16.msra.mxu0 %v874
        %918 = vmatprep.subr.bf16.mxu0 0
        %919 = vmatpush1.bf16.msra.mxu0 %v875
        %920 = vmatprep.subr.bf16.mxu0 0
        %921 = vmatpush1.bf16.msra.mxu0 %v876
        %922 = vmatprep.subr.bf16.mxu0 0
        %923 = vmatpush1.bf16.msra.mxu0 %v877
        %924 = vmatprep.subr.bf16.mxu0 0
        %925 = vmatpush1.bf16.msra.mxu0 %v878
        %926 = vmatprep.subr.bf16.mxu0 0
        %927 = vmatpush1.bf16.msra.mxu0 %v879
        %928 = vmatprep.mubr.bf16.mxu0 %v758
        %929 = vmatmul.mubr.bf16.gmra.mrb[0].mxu0 %v757
        %v930 = vpop.f32.mrb[0].mxu0
        %v931 = vadd.f32 %v798, %v930
        %v932 = vpop.f32.mrb[0].mxu0
        %v933 = vpop.f32.mrb[0].mxu0
        %v934 = vadd.f32 %v798, %v933
        %v935 = vpop.f32.mrb[0].mxu0
        %936 = vmatprep.mubr.bf16.mxu0 %v760
        %937 = vmatmul.mubr.bf16.gmra.mrb[0].mxu0 %v759
        %v938 = vpop.f32.mrb[0].mxu0
        %v939 = vadd.f32 %v798, %v938
        %v940 = vpop.f32.mrb[0].mxu0
        %v941 = vpop.f32.mrb[0].mxu0
        %v942 = vadd.f32 %v798, %v941
        %v943 = vpop.f32.mrb[0].mxu0
        %944 = vdwg.mxu0
        %v945 = vtanh.pop %v931
        %v946 = vtanh.pop %v934
        %v947 = vtanh.pop %v939
        %v948 = vtanh.pop %v942
        %vm949 = vcmask 64512
        %950 = vst.msk [vmem:[%s310] sm:$0xff] %vm949, %v945
        %951 = vst.msk [vmem:[%s310 + $0x8] sm:$0xff] %vm949, %v946
        %952 = vst.msk [vmem:[%s310 + $0x10] sm:$0xff] %vm949, %v947
        %953 = vst.msk [vmem:[%s310 + $0x18] sm:$0xff] %vm949, %v948
        %s954 = smul.u32 4, %s20
        %p955 = scmp.lt.s32.totalorder %s954, 15
        %s956 = scalar_select %p955, %s954, 15
        %s957 = smul.addr %s956, 8
        %s958 = scalar_lea.vmem %s7, %s957
        // Predicated region
        $region57: #{tpu_custom_call.1} parent=47 // pred_check
          %p959 = pneg %p190
        $region58: #{tpu_custom_call.1} parent=47 // pred_check_branch
          %961 = sbr.rel (%p959) target = $region60
        $region59: #{tpu_custom_call.1} parent=47 // pred_region
          %s962 = smul.u32 4, %s20
        $region60: #{tpu_custom_call.1} parent=47 // pred_fallthru
          _
      $region48: #{tpu_custom_call.1} parent=5 // pred_fallthru
        _
      %p963 = scmp.le.s32.totalorder 2, %s15
      // Predicated region
      $region61: #{tpu_custom_call.1} parent=5 // pred_check
        %p964 = pneg %p963
      $region62: #{tpu_custom_call.1} parent=5 // pred_check_branch
        %966 = sbr.rel (%p964) target = $region64
      $region63: #{tpu_custom_call.1} parent=5 // pred_region
        %s967 = ssub.s32 %s15, 2
        // Predicated region
        $region65: #{tpu_custom_call.1} parent=63 // pred_check
          %p968 = pneg %p196
        $region66: #{tpu_custom_call.1} parent=63 // pred_check_branch
          %970 = sbr.rel (%p968) target = $region68
        $region67: #{tpu_custom_call.1} parent=63 // pred_region
          %s971 = smul.u32 4, %s21
          %p972 = scmp.lt.s32.totalorder %s971, 15
          %s973 = scalar_select %p972, %s971, 15
          %s974 = smul.addr %s973, 8
          %s975 = scalar_lea.vmem %s7, %s974
        $region68: #{tpu_custom_call.1} parent=63 // pred_fallthru
          _
      $region64: #{tpu_custom_call.1} parent=5 // pred_fallthru
        _
    $region6: #{tpu_custom_call.1} parent=1 // loop_footer
      %s19 = sadd.s32 1, %s15
    $region7: #{tpu_custom_call.1} parent=1 // loop_footer_branch
      %14 = sbr.rel target = $region3
    $region8: #{tpu_custom_call.1} parent=1 // loop_exit
      _
    %976 = vsyncpa [#allocation3], 1
    %s977 = scalar_lea.sflag [#allocation3], 1
    %978 = vsyncpa %s977, 1
    %979 = vsyncpa [#allocation5], 1

</llo_original>
